<compile_context>
chip_gen: v6e
topology: v6e:2x2x1
jax: 0.10.0
libtpu: 0.0.40
codegen_flags: <defaults>
</compile_context>

<pallas_src>
import numpy as np
import jax
import jax.numpy as jnp
from jax.experimental import pallas as pl
from jax.experimental.pallas import tpu as pltpu


def _lagrange_quad_coeffs(xs, ys):
    """Coefficients [a, b, c] of the quadratic through 3 points (highest degree
    first), matching scipy.interpolate.lagrange(xs, ys).c."""
    return np.polyfit(np.asarray(xs, np.float64), np.asarray(ys, np.float64), 2)


def make_stepfunc_params(bound: float) -> np.ndarray:
    """Replicates Mask.update(bound): 6 coeffs = left quad (3) + right quad (3).

    NOTE: faithful to the PyTorch module -- the polynomial fit clamps the bound
    to 0.005 when 0 < bound < 0.005, while the forward's region comparisons
    keep using the *unclamped* bound (exactly what Mask.update / Step_function
    do in the original code).
    """
    b = bound
    if 0.0 < b < 0.005:
        b = 0.005
    left = _lagrange_quad_coeffs([-b, -b / 2.0, 0.0], [0.0, 0.125, 0.5])
    right = _lagrange_quad_coeffs([0.0, b / 2.0, b], [0.5, 0.875, 1.0])
    return np.concatenate([left, right]).astype(np.float32)  # shape (6,)


def compute_channel_mask(mask_weight, bound: float, stepfunc_params):
    """Per-channel mask (C,), mirroring Step_function.forward's mask build.

    O(C) work, hoisted out of the HBM-bandwidth-bound Pallas kernel.
    """
    mw = jnp.asarray(mask_weight, dtype=jnp.float32)
    p = np.asarray(stepfunc_params, dtype=np.float32)
    if bound != 0.0:
        one_mask = mw > bound
        left_mask = jnp.logical_and(mw >= -bound, mw <= 0.0)
        right_mask = jnp.logical_and(mw > 0.0, mw <= bound)
        left_val = (mw * p[0] + p[1]) * mw + p[2]
        right_val = (mw * p[3] + p[4]) * mw + p[5]
        mask = jnp.where(
            one_mask,
            jnp.float32(1.0),
            jnp.where(
                left_mask,
                left_val,
                jnp.where(right_mask, right_val, jnp.float32(0.0)),
            ),
        )
    else:
        # Hard step: mask_weight > 0 (bound == 0 on this path).
        mask = (mw > 0.0).astype(jnp.float32)
    return mask


def _mask_mul_kernel(mask_ref, x_ref, o_ref):
    # mask_ref: VMEM (T_R, 1) float32; x_ref/o_ref: VMEM (T_R, T_HW)
    # Single broadcast multiply over the lane (spatial) axis.
    o_ref[...] = (x_ref[...] * mask_ref[...]).astype(o_ref.dtype)


def _pick_lane_tile(hw: int, lane: int = 128, max_tile: int = 2048) -> int:
    """Lane (last-dim) tile: multiple of 128 when possible, capped at ~2048."""
    if hw % lane != 0:
        return hw                     # full-dim block (allowed); rare fallback
    if hw <= max_tile:
        return hw
    best = max_tile                   # cdiv grid masks any remainder block
    t = lane
    while t <= max_tile:
        if hw % t == 0:
            best = t
        t += lane
    return best


def _pick_row_tile(rows: int, t_hw: int, elem_bytes: int = 4,
                   sublane: int = 8, max_block_bytes: int = 2 << 20) -> int:
    """Row (second-minor) tile: multiple of 8, block capped at ~2 MiB so
    double-buffered in+out fits the smallest default scoped VMEM (v5e)."""
    max_rows = max(sublane,
                   (max_block_bytes // (t_hw * elem_bytes)) // sublane * sublane)
    if rows <= max_rows:
        return rows                   # equals full array dim (always allowed)
    return max_rows


def mask_forward(x_nchw, mask_weight, bound: float, stepfunc_params):
    """x_nchw: (N, C, H, W); mask_weight: (C,) float32."""
    N, C, H, W = x_nchw.shape
    HW = H * W
    rows = N * C

    # Hoisted O(C) mask computation; one mask value per (n, c) row.
    mask_c = compute_channel_mask(mask_weight, bound, stepfunc_params)   # (C,)
    mask_rows = jnp.tile(mask_c, N).reshape(rows, 1)                     # (N*C, 1)

    # 2-D lane-dense view: rows on sublanes, flattened spatial on lanes.
    x2 = x_nchw.reshape(rows, HW)
    elem_bytes = x2.dtype.itemsize

    t_hw = _pick_lane_tile(HW)
    t_r = _pick_row_tile(rows, t_hw, elem_bytes=elem_bytes)
    grid = (pl.cdiv(rows, t_r), pl.cdiv(HW, t_hw))

    out = pl.pallas_call(
        _mask_mul_kernel,
        out_shape=jax.ShapeDtypeStruct((rows, HW), x2.dtype),
        grid=grid,
        in_specs=[
            pl.BlockSpec((t_r, 1), lambda r, s: (r, 0)),      # per-row mask
            pl.BlockSpec((t_r, t_hw), lambda r, s: (r, s)),   # x tile
        ],
        out_specs=pl.BlockSpec((t_r, t_hw), lambda r, s: (r, s)),
        compiler_params=pltpu.CompilerParams(
            # Both axes independent -> v7x's 2 TensorCores both get work.
            dimension_semantics=("parallel", "parallel"),
        ),
        cost_estimate=pl.CostEstimate(
            flops=rows * HW,
            transcendentals=0,
            bytes_accessed=2 * rows * HW * elem_bytes + rows * 4,
        ),
    )(mask_rows, x2)

    return out.reshape(N, C, H, W)


def mask_forward_ref(x_nchw, mask_weight, bound: float, stepfunc_params):
    """Plain-JAX reference mirroring Step_function.forward."""
    mw = mask_weight
    p = stepfunc_params
    if bound != 0.0:
        one_mask = mw > bound
        left_mask = jnp.logical_and(mw >= -bound, mw <= 0.0)
        right_mask = jnp.logical_and(mw > 0.0, mw <= bound)
        mask = jnp.where(
            one_mask,
            1.0,
            jnp.where(
                left_mask,
                (mw * p[0] + p[1]) * mw + p[2],
                jnp.where(right_mask, (mw * p[3] + p[4]) * mw + p[5], 0.0),
            ),
        )
    else:
        mask = (mw > bound).astype(jnp.float32)
    return x_nchw * mask[None, :, None, None]


if __name__ == "__main__":
    key = jax.random.PRNGKey(0)
    k_x, k_w = jax.random.split(key)

    # Small shapes consistent with an NCHW conv feature map.
    N, C, H, W = 2, 4, 16, 16
    x = jax.random.normal(k_x, (N, C, H, W), dtype=jnp.float32)

    # Mask module parameters (deterministic synthetic init, matching __init__):
    #   mask_weight ~ Normal(0, 0.2), bound = 1.0 (from self.update(bound=1.0)).
    mask_weight = 0.2 * jax.random.normal(k_w, (C,), dtype=jnp.float32)
    bound = 1.0
    stepfunc_params = make_stepfunc_params(bound)  # (6,) left+right quad coeffs

    out = mask_forward(x, mask_weight, bound, stepfunc_params)
    out = jax.block_until_ready(out)

    ref = mask_forward_ref(x, mask_weight, bound, jnp.asarray(stepfunc_params))
    np.testing.assert_allclose(np.asarray(out), np.asarray(ref), rtol=1e-6, atol=1e-6)

    print("KERNEL_OK")
</pallas_src>

<mosaic_0001>
module attributes {stable_mosaic.version = 11 : i64} {
  func.func @_mask_mul_kernel(%arg0: i32, %arg1: i32, %arg2: memref<8x1xf32, #tpu.memory_space<vmem>>, %arg3: memref<8x256xf32, #tpu.memory_space<vmem>>, %arg4: memref<8x256xf32, #tpu.memory_space<vmem>>) attributes {dimension_semantics = [#tpu.dimension_semantics<parallel>, #tpu.dimension_semantics<parallel>], iteration_bounds = array<i64: 1, 1>, scalar_prefetch = 0 : i64, scratch_operands = 0 : i64, tpu.core_type = #tpu.core_type<tc>, window_params = [{transform_indices = @transform_0, window_bounds = array<i64: 8, 1>}, {transform_indices = @transform_1, window_bounds = array<i64: 8, 256>}, {transform_indices = @transform_2, window_bounds = array<i64: 8, 256>}]} {
    %c0 = arith.constant 0 : index
    %c0_0 = arith.constant 0 : index
    %0 = vector.load %arg3[%c0, %c0_0] : memref<8x256xf32, #tpu.memory_space<vmem>>, vector<8x256xf32>
    %c0_1 = arith.constant 0 : index
    %c0_2 = arith.constant 0 : index
    %1 = vector.load %arg2[%c0_1, %c0_2] : memref<8x1xf32, #tpu.memory_space<vmem>>, vector<8x1xf32>
    %2 = vector.broadcast %1 : vector<8x1xf32> to vector<8x256xf32>
    %3 = arith.mulf %0, %2 : vector<8x256xf32>
    %c0_3 = arith.constant 0 : index
    %c0_4 = arith.constant 0 : index
    %4 = vector.load %arg4[%c0_3, %c0_4] : memref<8x256xf32, #tpu.memory_space<vmem>>, vector<8x256xf32>
    tpu.vector_store %arg4[%c0_3, %c0_4], %3 {strides = array<i32>} : memref<8x256xf32, #tpu.memory_space<vmem>>, vector<8x256xf32>,
    return
  }
  func.func @transform_0(%arg0: i32, %arg1: i32) -> (i32, i32) {
    %c0_i32 = arith.constant 0 : i32
    %c0_i32_0 = arith.constant 0 : i32
    return %arg0, %c0_i32 : i32, i32
  }
  func.func @transform_1(%arg0: i32, %arg1: i32) -> (i32, i32) {
    %c0_i32 = arith.constant 0 : i32
    return %arg0, %arg1 : i32, i32
  }
  func.func @transform_2(%arg0: i32, %arg1: i32) -> (i32, i32) {
    %c0_i32 = arith.constant 0 : i32
    return %arg0, %arg1 : i32, i32
  }
}

</mosaic_0001>

<llo_original>
// kernel: tpu_custom_call.1
$region0: #{tpu_custom_call.1}
  #allocation0 [shape = 'u32[]', space=smem, size = 0x4, offset = 0x4, fixed_abs, tag = 'smem constant byte address 0x4 - core index']
  #allocation1 [shape = 'u32[144,128]{1,0:T(1,128)}', space=vmem, size = 0x12000, scoped, tag = 'internal scratch']
  %s0 = inlined_call_operand.vmem [shape: f32[8,1], index: 0, kind: input, shape index: {}]
  %s1 = inlined_call_operand.hbm [shape: f32[8,256], index: 1, kind: input, shape index: {}]
  %s2 = inlined_call_operand.hbm [shape: f32[8,256], index: 2, kind: output, shape index: {}]
  %s3 = sld [smem:[#allocation0]]
  $region22: #{tpu_custom_call.1} parent=0
    _
  %s5 = ssub.s32 1, %s3
  %s6 = scalar_select 0, %s5, %s3
  $region1: #{tpu_custom_call.1} parent=0
    #allocation2 [shape = 'u8[8192]{0}', space=vmem, size = 0x2000, scoped, tag = 'input window, operand 1, single buffered']
    #allocation3 [shape = 's32[1]{0}', space=sflag, size = 0x4, scoped, tag = 'scoped memory for tpu_custom_call.1']
    #allocation4 [shape = 's32[1]{0}', space=sflag, size = 0x4, scoped, tag = 'scoped memory for tpu_custom_call.1']
    #allocation5 [shape = 'u8[8192]{0}', space=vmem, size = 0x2000, scoped, tag = 'output window, operand 0, single buffered']
    %7 = vsyncpa [#allocation3], 0
    %8 = vsyncpa [#allocation4], 0
    // Predicated region
    $region2: #{tpu_custom_call.1} parent=1 // pred_check
      _
    $region3: #{tpu_custom_call.1} parent=1 // pred_check_branch
      %10 = sbr.rel (0) target = $region5
    $region4: #{tpu_custom_call.1} parent=1 // pred_region
      _
    $region5: #{tpu_custom_call.1} parent=1 // pred_fallthru
      _
    // Predicated region
    $region6: #{tpu_custom_call.1} parent=1 // pred_check
      _
    $region7: #{tpu_custom_call.1} parent=1 // pred_check_branch
      %12 = sbr.rel (0) target = $region9
    $region8: #{tpu_custom_call.1} parent=1 // pred_region
      %s14 = ssub.s32 256, 256
      %15 = vsyncadd [#allocation3], %s14
      %s17 = sshll.u32 [#allocation2], 4
      %s18 = int_to_ptr.vmem [resolvable:$true] %s17
      %20 = dma.hbm_to_vmem [thread:$0]  %s1, 256, %s18, [#allocation3]
    $region9: #{tpu_custom_call.1} parent=1 // pred_fallthru
      _
    // Predicated region
    $region10: #{tpu_custom_call.1} parent=1 // pred_check
      _
    $region11: #{tpu_custom_call.1} parent=1 // pred_check_branch
      %22 = sbr.rel (0) target = $region13
    $region12: #{tpu_custom_call.1} parent=1 // pred_region
      %23 = dma.done [#allocation3], 256
    $region13: #{tpu_custom_call.1} parent=1 // pred_fallthru
      _
    %v24 = vld [vmem:[#allocation2] sm:$0xff]
    %v25 = vld [vmem:[#allocation2 + $0x8] sm:$0xff]
    %v26 = vld [vmem:[%s0] sm:$0xff]
    %28 = vset.pattern.permute.xlu0 0
    %29 = vperm.xlu0 %28, %v26
    %v30 = vpop.permute.xlu0 %29
    %v32 = vmul.f32 %v24, %v30
    %v33 = vmul.f32 %v25, %v30
    %34 = vst [vmem:[#allocation5] sm:$0xff] %v32
    %35 = vst [vmem:[#allocation5 + $0x8] sm:$0xff] %v33
    // Predicated region
    $region14: #{tpu_custom_call.1} parent=1 // pred_check
      _
    $region15: #{tpu_custom_call.1} parent=1 // pred_check_branch
      %37 = sbr.rel (0) target = $region17
    $region16: #{tpu_custom_call.1} parent=1 // pred_region
      %s39 = ssub.s32 256, 256
      %40 = vsyncadd [#allocation4], %s39
      %s42 = sshll.u32 [#allocation5], 4
      %s43 = int_to_ptr.vmem [resolvable:$true] %s42
      %45 = dma.vmem_to_hbm [thread:$0]  %s43, 256, %s2, [#allocation4]
    $region17: #{tpu_custom_call.1} parent=1 // pred_fallthru
      _
    // Predicated region
    $region18: #{tpu_custom_call.1} parent=1 // pred_check
      _
    $region19: #{tpu_custom_call.1} parent=1 // pred_check_branch
      %47 = sbr.rel (0) target = $region21
    $region20: #{tpu_custom_call.1} parent=1 // pred_region
      %48 = dma.done [#allocation4], 256
    $region21: #{tpu_custom_call.1} parent=1 // pred_fallthru
      _
    %49 = vsyncpa [#allocation3], 1
    %50 = vsyncpa [#allocation4], 1

</llo_original>
